<compile_context>
chip_gen: v7x
topology: tpu7x:2x2x1
jax: 0.10.0
libtpu: 0.0.40
codegen_flags: <defaults>
</compile_context>

<pallas_src>
import numpy as np
import jax
import jax.numpy as jnp
from jax.experimental import pallas as pl
from jax.experimental.pallas import tpu as pltpu

LANE = 128  # TPU lane width.


def _make_depth_conv_kernel(th, kw_axis, full_x):
    """Kernel factory.

    Block layouts seen by the kernel:
      kw_axis == 1 (C >= 128): xp (rows, W+2, 128), w (9, th, W, 128), o (th, W, 128)
      kw_axis == 2 (C <  128): xp (rows, C, W+2),   w (9, th, C, W),   o (th, C, W)
    `rows` is th+2 (tiled x) or Hp+2 (full-H x block, windowed in-kernel).
    """
    def kernel(xp_ref, w_ref, o_ref):
        w_len = o_ref.shape[kw_axis]
        if full_x:
            h0 = pl.multiple_of(pl.program_id(2) * th, th)
        else:
            h0 = 0
        acc = jnp.zeros(o_ref.shape, jnp.float32)
        for kw in range(3):
            # One shifted window load per kw in the *native* dtype; the kh
            # offsets below are free leading-dim slices of the loaded window.
            if kw_axis == 1:
                x_kw = xp_ref[pl.ds(h0, th + 2), kw:kw + w_len, :]
            else:
                x_kw = xp_ref[pl.ds(h0, th + 2), :, kw:kw + w_len]
            for kh in range(3):
                tap = w_ref[kh * 3 + kw]
                # Native-dtype multiply (bf16 on bf16 inputs), f32 accumulate.
                acc = acc + (tap * x_kw[kh:kh + th]).astype(jnp.float32)
        # TODO(synk): verify in the bundle dump that `acc` does not round-trip
        # VMEM per tap; if it does, switch to a fori_loop over row groups with
        # a register-resident accumulator so each output element is stored once.
        o_ref[...] = acc.astype(o_ref.dtype)
    return kernel


def _round_up(a, b):
    return (a + b - 1) // b * b


def _pick_h_tile(H, foot_fn, wblk_fn, target_bytes, budget_bytes):
    """Largest row tile whose double-buffered footprint fits the budget, capped
    at the first size whose weight block reaches `target_bytes`; prefers
    divisors of H (no H padding)."""
    max_th = 1
    for th in range(1, H + 1):
        if foot_fn(th) <= budget_bytes:
            max_th = th
        else:
            break
    th_cap = max_th
    for th in range(1, max_th + 1):
        if wblk_fn(th) >= target_bytes:
            th_cap = th
            break
    for th in range(th_cap, 0, -1):          # prefer a divisor near th_cap
        if H % th == 0 and 2 * th >= th_cap:
            return th
    return th_cap


def depth_conv(x, conv_weights, *, vmem_budget_bytes=None, target_block_bytes=None,
               allow_full_x=True, force_h_tile=None):
    """Spatially varying depthwise 3x3 conv (CC-FPSE DepthConv.forward).

    x            : (N, C, H, W)
    conv_weights : any shape that reshapes to (N, C, 9, H, W), tap k = kh*3+kw
                   minor to channel (e.g. (N, C*9, H, W)).
    Accumulation is f32 regardless of input dtype; bf16 inputs halve the HBM
    traffic of the dominant weights stream (bf16 products, f32 accumulation).
    """
    N, C, H, W = x.shape
    out_dtype = jnp.result_type(x.dtype, conv_weights.dtype)
    in_bytes = max(np.dtype(x.dtype).itemsize, np.dtype(conv_weights.dtype).itemsize)
    out_bytes = np.dtype(out_dtype).itemsize

    # Generation-aware VMEM budgeting (64 MiB/TC on v7x, 128 MiB on v5e/v6e).
    try:
        info = pltpu.get_tpu_info()
        vmem_cap = int(getattr(info, "vmem_capacity_bytes", 64 * 1024 * 1024))
    except Exception:
        vmem_cap = 64 * 1024 * 1024
    if vmem_budget_bytes is None:
        vmem_budget_bytes = min(vmem_cap // 2, 64 * 1024 * 1024)
    if target_block_bytes is None:
        target_block_bytes = (4 if vmem_cap >= 96 * 1024 * 1024 else 2) * 1024 * 1024

    small_c = C < LANE
    if small_c:
        # C on sublanes, W on lanes: no channel padding, exact HBM traffic.
        n_c, kw_axis = 1, 2
        plane = C * W
        x_plane = C * (W + 2)
    else:
        # channels-last 128-lane slabs; slab is an outer (contiguous) HBM axis.
        Cp = _round_up(C, LANE)
        n_c, kw_axis = Cp // LANE, 1
        plane = W * LANE
        x_plane = (W + 2) * LANE

    def wblk(th):  # per-step weights block (the dominant stream)
        return 9 * th * plane * in_bytes

    def xblk(th):
        return (th + 2) * x_plane * in_bytes

    def oblk(th):
        return th * plane * out_bytes

    def foot(th):  # double-buffered blocks + rough in-kernel temporaries
        temps = (th + 2) * x_plane * in_bytes + 3 * th * plane * 4
        return 2 * (xblk(th) + wblk(th) + oblk(th)) + temps

    if force_h_tile is not None:
        th = int(force_h_tile)
    else:
        th = _pick_h_tile(H, foot, wblk, target_block_bytes, vmem_budget_bytes)
    n_t = pl.cdiv(H, th)
    Hp = n_t * th
    pad_h = Hp - H

    # Full-H x block per (n, slab) when it fits: avoids materializing the
    # overlapping halo tiles of x in HBM (one fewer write+read of x).
    x_full_blk = (Hp + 2) * x_plane * in_bytes
    foot_now = foot(th)
    full_x = bool(allow_full_x) and (foot_now - 2 * xblk(th) + 2 * x_full_blk) <= vmem_budget_bytes
    if full_x:
        foot_now = foot_now - 2 * xblk(th) + 2 * x_full_blk

    vmem_limit = int(min(max(foot_now + (4 << 20), 16 << 20, vmem_budget_bytes),
                         (vmem_cap * 3) // 4))

    # ---- layout plumbing (would be fused into producers in the full net) ----
    w5 = conv_weights.reshape(N, C, 9, H, W)
    if small_c:
        x_s = jnp.transpose(x, (0, 2, 1, 3))                              # (N, H, C, W)
        x_s = jnp.pad(x_s, ((0, 0), (1, 1 + pad_h), (0, 0), (1, 1)))       # (N, Hp+2, C, W+2)
        w_s = jnp.transpose(w5, (0, 2, 3, 1, 4))                           # (N, 9, H, C, W)
        if pad_h:
            w_s = jnp.pad(w_s, ((0, 0), (0, 0), (0, pad_h), (0, 0), (0, 0)))
        if full_x:
            x_in = x_s
            x_spec = pl.BlockSpec((None, Hp + 2, C, W + 2),
                                  lambda n, c, t: (n, 0, 0, 0))
        else:
            row_idx = jnp.arange(n_t)[:, None] * th + jnp.arange(th + 2)[None, :]
            x_in = x_s[:, row_idx]                                        # (N, n_t, th+2, C, W+2)
            x_spec = pl.BlockSpec((None, None, th + 2, C, W + 2),
                                  lambda n, c, t: (n, t, 0, 0, 0))
        w_spec = pl.BlockSpec((None, 9, th, C, W), lambda n, c, t: (n, 0, t, 0, 0))
        out_shape = jax.ShapeDtypeStruct((N, Hp, C, W), out_dtype)
        o_spec = pl.BlockSpec((None, th, C, W), lambda n, c, t: (n, t, 0, 0))
    else:
        Cp = n_c * LANE
        xc = jnp.pad(x, ((0, 0), (0, Cp - C), (0, 0), (0, 0))) if Cp != C else x
        x_s = jnp.transpose(xc.reshape(N, n_c, LANE, H, W), (0, 1, 3, 4, 2))  # (N,n_c,H,W,128)
        x_s = jnp.pad(x_s, ((0, 0), (0, 0), (1, 1 + pad_h), (1, 1), (0, 0)))  # (N,n_c,Hp+2,W+2,128)
        wc = jnp.pad(w5, ((0, 0), (0, Cp - C), (0, 0), (0, 0), (0, 0))) if Cp != C else w5
        w_s = jnp.transpose(wc.reshape(N, n_c, LANE, 9, H, W), (0, 1, 3, 4, 5, 2))
        if pad_h:
            w_s = jnp.pad(w_s, ((0, 0), (0, 0), (0, 0), (0, pad_h), (0, 0), (0, 0)))
        if full_x:
            x_in = x_s
            x_spec = pl.BlockSpec((None, None, Hp + 2, W + 2, LANE),
                                  lambda n, c, t: (n, c, 0, 0, 0))
        else:
            row_idx = jnp.arange(n_t)[:, None] * th + jnp.arange(th + 2)[None, :]
            x_in = x_s[:, :, row_idx]                                     # (N,n_c,n_t,th+2,W+2,128)
            x_spec = pl.BlockSpec((None, None, None, th + 2, W + 2, LANE),
                                  lambda n, c, t: (n, c, t, 0, 0, 0))
        w_spec = pl.BlockSpec((None, None, 9, th, W, LANE),
                              lambda n, c, t: (n, c, 0, t, 0, 0))
        out_shape = jax.ShapeDtypeStruct((N, n_c, Hp, W, LANE), out_dtype)
        o_spec = pl.BlockSpec((None, None, th, W, LANE),
                              lambda n, c, t: (n, c, t, 0, 0))

    out = pl.pallas_call(
        _make_depth_conv_kernel(th, kw_axis, full_x),
        out_shape=out_shape,
        grid=(N, n_c, n_t),
        in_specs=[x_spec, w_spec],
        out_specs=o_spec,
        compiler_params=pltpu.CompilerParams(
            dimension_semantics=("parallel", "parallel", "parallel"),
            vmem_limit_bytes=vmem_limit),
    )(x_in, w_s)

    # TODO(synk): keep channels-last for the downstream consumer and fuse this
    # final transpose into it (it is a full extra HBM pass over the output).
    if small_c:
        return jnp.transpose(out[:, :H], (0, 2, 1, 3))                    # (N, C, H, W)
    out = jnp.transpose(out[:, :, :H], (0, 1, 4, 2, 3)).reshape(N, n_c * LANE, H, W)
    return out[:, :C]


def _reference(x, conv_weights):
    """Pure-JAX reference mirroring the PyTorch forward (unfold + mul + sum),
    f32 accumulation, same tap order as the kernel."""
    N, C, H, W = x.shape
    xf = x.astype(jnp.float32)
    wf = conv_weights.reshape(N, C, 9, H, W).astype(jnp.float32)
    xp = jnp.pad(xf, ((0, 0), (0, 0), (1, 1), (1, 1)))
    out = jnp.zeros((N, C, H, W), jnp.float32)
    for kw in range(3):
        for kh in range(3):
            k = kh * 3 + kw
            out = out + wf[:, :, k] * xp[:, :, kh:kh + H, kw:kw + W]
    return out


if __name__ == "__main__":
    # Small shapes consistent with the module (generator starts at 16x16).
    N, C, H, W = 2, 4, 16, 16
    key = jax.random.PRNGKey(0)
    kx, kw_ = jax.random.split(key)
    x = jax.random.normal(kx, (N, C, H, W), dtype=jnp.float32)
    conv_weights = jax.random.normal(kw_, (N, C * 9, H, W), dtype=jnp.float32)

    # 1) f32, small-C path (C < 128: no channel padding, W on lanes).
    out = jax.block_until_ready(depth_conv(x, conv_weights))
    ref = _reference(x, conv_weights)
    np.testing.assert_allclose(np.asarray(out.astype(jnp.float32)),
                               np.asarray(ref), rtol=1e-4, atol=1e-4)

    # 2) bf16 path: bf16 products, f32 accumulation (halved HBM traffic).
    xb = x.astype(jnp.bfloat16)
    wb = conv_weights.astype(jnp.bfloat16)
    outb = jax.block_until_ready(depth_conv(xb, wb))
    refb = _reference(xb, wb)
    np.testing.assert_allclose(np.asarray(outb.astype(jnp.float32)),
                               np.asarray(refb), rtol=2e-2, atol=1e-1)

    # 3) large-C path (C > 128 -> two 128-lane slabs, slab-leading layout).
    N2, C2, H2, W2 = 1, 160, 8, 8
    k2x, k2w = jax.random.split(jax.random.PRNGKey(1))
    x2 = jax.random.normal(k2x, (N2, C2, H2, W2), dtype=jnp.float32)
    w2 = jax.random.normal(k2w, (N2, C2 * 9, H2, W2), dtype=jnp.float32)
    out2 = jax.block_until_ready(depth_conv(x2, w2))
    ref2 = _reference(x2, w2)
    np.testing.assert_allclose(np.asarray(out2.astype(jnp.float32)),
                               np.asarray(ref2), rtol=1e-4, atol=1e-4)

    # 4) forced H tiling + H padding + gathered-x fallback path (small-C).
    out4 = jax.block_until_ready(depth_conv(x, conv_weights,
                                            force_h_tile=6, allow_full_x=False))
    np.testing.assert_allclose(np.asarray(out4.astype(jnp.float32)),
                               np.asarray(ref), rtol=1e-4, atol=1e-4)

    # 5) forced H tiling with full-H x block + in-kernel windowing (large-C).
    out5 = jax.block_until_ready(depth_conv(x2, w2, force_h_tile=3))
    np.testing.assert_allclose(np.asarray(out5.astype(jnp.float32)),
                               np.asarray(ref2), rtol=1e-4, atol=1e-4)

    print("KERNEL_OK")
</pallas_src>

<mosaic_0001>
module attributes {stable_mosaic.version = 11 : i64} {
  func.func @kernel(%arg0: i32, %arg1: i32, %arg2: i32, %arg3: memref<1x18x4x18xf32, #tpu.memory_space<vmem>>, %arg4: memref<1x9x16x4x16xf32, #tpu.memory_space<vmem>>, %arg5: memref<1x16x4x16xf32, #tpu.memory_space<vmem>>) attributes {dimension_semantics = [#tpu.dimension_semantics<parallel>, #tpu.dimension_semantics<parallel>, #tpu.dimension_semantics<parallel>], iteration_bounds = array<i64: 2, 1, 1>, scalar_prefetch = 0 : i64, scratch_operands = 0 : i64, tpu.core_type = #tpu.core_type<tc>, window_params = [{transform_indices = @transform_0, window_bounds = array<i64: 1, 18, 4, 18>}, {transform_indices = @transform_1, window_bounds = array<i64: 1, 9, 16, 4, 16>}, {transform_indices = @transform_2, window_bounds = array<i64: 1, 16, 4, 16>}]} {
    %c16_i32 = arith.constant 16 : i32
    %0 = arith.muli %arg2, %c16_i32 : i32
    %1 = tpu.assume_multiple %0, 16 : i32
    %cst = arith.constant 0.000000e+00 : f32
    %2 = vector.broadcast %cst : f32 to vector<16x4x16xf32>
    %c0 = arith.constant 0 : index
    %3 = arith.index_cast %1 : i32 to index
    %c0_0 = arith.constant 0 : index
    %c0_1 = arith.constant 0 : index
    %4 = vector.load %arg3[%c0, %3, %c0_0, %c0_1] : memref<1x18x4x18xf32, #tpu.memory_space<vmem>>, vector<1x18x4x16xf32>
    %5 = vector.shape_cast %4 : vector<1x18x4x16xf32> to vector<18x4x16xf32>
    %c0_2 = arith.constant 0 : index
    %c0_3 = arith.constant 0 : index
    %c0_4 = arith.constant 0 : index
    %c0_5 = arith.constant 0 : index
    %c0_6 = arith.constant 0 : index
    %6 = vector.load %arg4[%c0_2, %c0_3, %c0_4, %c0_5, %c0_6] : memref<1x9x16x4x16xf32, #tpu.memory_space<vmem>>, vector<1x1x16x4x16xf32>
    %7 = vector.shape_cast %6 : vector<1x1x16x4x16xf32> to vector<16x4x16xf32>
    %8 = vector.extract_strided_slice %5 {offsets = [0, 0, 0], sizes = [16, 4, 16], strides = [1, 1, 1]} : vector<18x4x16xf32> to vector<16x4x16xf32>
    %9 = arith.mulf %7, %8 : vector<16x4x16xf32>
    %10 = arith.addf %2, %9 : vector<16x4x16xf32>
    %c0_7 = arith.constant 0 : index
    %c3 = arith.constant 3 : index
    %c0_8 = arith.constant 0 : index
    %c0_9 = arith.constant 0 : index
    %c0_10 = arith.constant 0 : index
    %11 = vector.load %arg4[%c0_7, %c3, %c0_8, %c0_9, %c0_10] : memref<1x9x16x4x16xf32, #tpu.memory_space<vmem>>, vector<1x1x16x4x16xf32>
    %12 = vector.shape_cast %11 : vector<1x1x16x4x16xf32> to vector<16x4x16xf32>
    %13 = vector.extract_strided_slice %5 {offsets = [1, 0, 0], sizes = [16, 4, 16], strides = [1, 1, 1]} : vector<18x4x16xf32> to vector<16x4x16xf32>
    %14 = arith.mulf %12, %13 : vector<16x4x16xf32>
    %15 = arith.addf %10, %14 : vector<16x4x16xf32>
    %c0_11 = arith.constant 0 : index
    %c6 = arith.constant 6 : index
    %c0_12 = arith.constant 0 : index
    %c0_13 = arith.constant 0 : index
    %c0_14 = arith.constant 0 : index
    %16 = vector.load %arg4[%c0_11, %c6, %c0_12, %c0_13, %c0_14] : memref<1x9x16x4x16xf32, #tpu.memory_space<vmem>>, vector<1x1x16x4x16xf32>
    %17 = vector.shape_cast %16 : vector<1x1x16x4x16xf32> to vector<16x4x16xf32>
    %18 = vector.extract_strided_slice %5 {offsets = [2, 0, 0], sizes = [16, 4, 16], strides = [1, 1, 1]} : vector<18x4x16xf32> to vector<16x4x16xf32>
    %19 = arith.mulf %17, %18 : vector<16x4x16xf32>
    %20 = arith.addf %15, %19 : vector<16x4x16xf32>
    %c0_15 = arith.constant 0 : index
    %21 = arith.index_cast %1 : i32 to index
    %c0_16 = arith.constant 0 : index
    %c1 = arith.constant 1 : index
    %22 = vector.load %arg3[%c0_15, %21, %c0_16, %c1] : memref<1x18x4x18xf32, #tpu.memory_space<vmem>>, vector<1x18x4x16xf32>
    %23 = vector.shape_cast %22 : vector<1x18x4x16xf32> to vector<18x4x16xf32>
    %c0_17 = arith.constant 0 : index
    %c1_18 = arith.constant 1 : index
    %c0_19 = arith.constant 0 : index
    %c0_20 = arith.constant 0 : index
    %c0_21 = arith.constant 0 : index
    %24 = vector.load %arg4[%c0_17, %c1_18, %c0_19, %c0_20, %c0_21] : memref<1x9x16x4x16xf32, #tpu.memory_space<vmem>>, vector<1x1x16x4x16xf32>
    %25 = vector.shape_cast %24 : vector<1x1x16x4x16xf32> to vector<16x4x16xf32>
    %26 = vector.extract_strided_slice %23 {offsets = [0, 0, 0], sizes = [16, 4, 16], strides = [1, 1, 1]} : vector<18x4x16xf32> to vector<16x4x16xf32>
    %27 = arith.mulf %25, %26 : vector<16x4x16xf32>
    %28 = arith.addf %20, %27 : vector<16x4x16xf32>
    %c0_22 = arith.constant 0 : index
    %c4 = arith.constant 4 : index
    %c0_23 = arith.constant 0 : index
    %c0_24 = arith.constant 0 : index
    %c0_25 = arith.constant 0 : index
    %29 = vector.load %arg4[%c0_22, %c4, %c0_23, %c0_24, %c0_25] : memref<1x9x16x4x16xf32, #tpu.memory_space<vmem>>, vector<1x1x16x4x16xf32>
    %30 = vector.shape_cast %29 : vector<1x1x16x4x16xf32> to vector<16x4x16xf32>
    %31 = vector.extract_strided_slice %23 {offsets = [1, 0, 0], sizes = [16, 4, 16], strides = [1, 1, 1]} : vector<18x4x16xf32> to vector<16x4x16xf32>
    %32 = arith.mulf %30, %31 : vector<16x4x16xf32>
    %33 = arith.addf %28, %32 : vector<16x4x16xf32>
    %c0_26 = arith.constant 0 : index
    %c7 = arith.constant 7 : index
    %c0_27 = arith.constant 0 : index
    %c0_28 = arith.constant 0 : index
    %c0_29 = arith.constant 0 : index
    %34 = vector.load %arg4[%c0_26, %c7, %c0_27, %c0_28, %c0_29] : memref<1x9x16x4x16xf32, #tpu.memory_space<vmem>>, vector<1x1x16x4x16xf32>
    %35 = vector.shape_cast %34 : vector<1x1x16x4x16xf32> to vector<16x4x16xf32>
    %36 = vector.extract_strided_slice %23 {offsets = [2, 0, 0], sizes = [16, 4, 16], strides = [1, 1, 1]} : vector<18x4x16xf32> to vector<16x4x16xf32>
    %37 = arith.mulf %35, %36 : vector<16x4x16xf32>
    %38 = arith.addf %33, %37 : vector<16x4x16xf32>
    %c0_30 = arith.constant 0 : index
    %39 = arith.index_cast %1 : i32 to index
    %c0_31 = arith.constant 0 : index
    %c2 = arith.constant 2 : index
    %40 = vector.load %arg3[%c0_30, %39, %c0_31, %c2] : memref<1x18x4x18xf32, #tpu.memory_space<vmem>>, vector<1x18x4x16xf32>
    %41 = vector.shape_cast %40 : vector<1x18x4x16xf32> to vector<18x4x16xf32>
    %c0_32 = arith.constant 0 : index
    %c2_33 = arith.constant 2 : index
    %c0_34 = arith.constant 0 : index
    %c0_35 = arith.constant 0 : index
    %c0_36 = arith.constant 0 : index
    %42 = vector.load %arg4[%c0_32, %c2_33, %c0_34, %c0_35, %c0_36] : memref<1x9x16x4x16xf32, #tpu.memory_space<vmem>>, vector<1x1x16x4x16xf32>
    %43 = vector.shape_cast %42 : vector<1x1x16x4x16xf32> to vector<16x4x16xf32>
    %44 = vector.extract_strided_slice %41 {offsets = [0, 0, 0], sizes = [16, 4, 16], strides = [1, 1, 1]} : vector<18x4x16xf32> to vector<16x4x16xf32>
    %45 = arith.mulf %43, %44 : vector<16x4x16xf32>
    %46 = arith.addf %38, %45 : vector<16x4x16xf32>
    %c0_37 = arith.constant 0 : index
    %c5 = arith.constant 5 : index
    %c0_38 = arith.constant 0 : index
    %c0_39 = arith.constant 0 : index
    %c0_40 = arith.constant 0 : index
    %47 = vector.load %arg4[%c0_37, %c5, %c0_38, %c0_39, %c0_40] : memref<1x9x16x4x16xf32, #tpu.memory_space<vmem>>, vector<1x1x16x4x16xf32>
    %48 = vector.shape_cast %47 : vector<1x1x16x4x16xf32> to vector<16x4x16xf32>
    %49 = vector.extract_strided_slice %41 {offsets = [1, 0, 0], sizes = [16, 4, 16], strides = [1, 1, 1]} : vector<18x4x16xf32> to vector<16x4x16xf32>
    %50 = arith.mulf %48, %49 : vector<16x4x16xf32>
    %51 = arith.addf %46, %50 : vector<16x4x16xf32>
    %c0_41 = arith.constant 0 : index
    %c8 = arith.constant 8 : index
    %c0_42 = arith.constant 0 : index
    %c0_43 = arith.constant 0 : index
    %c0_44 = arith.constant 0 : index
    %52 = vector.load %arg4[%c0_41, %c8, %c0_42, %c0_43, %c0_44] : memref<1x9x16x4x16xf32, #tpu.memory_space<vmem>>, vector<1x1x16x4x16xf32>
    %53 = vector.shape_cast %52 : vector<1x1x16x4x16xf32> to vector<16x4x16xf32>
    %54 = vector.extract_strided_slice %41 {offsets = [2, 0, 0], sizes = [16, 4, 16], strides = [1, 1, 1]} : vector<18x4x16xf32> to vector<16x4x16xf32>
    %55 = arith.mulf %53, %54 : vector<16x4x16xf32>
    %56 = arith.addf %51, %55 : vector<16x4x16xf32>
    %c0_45 = arith.constant 0 : index
    %c0_46 = arith.constant 0 : index
    %c0_47 = arith.constant 0 : index
    %c0_48 = arith.constant 0 : index
    %57 = vector.load %arg5[%c0_45, %c0_46, %c0_47, %c0_48] : memref<1x16x4x16xf32, #tpu.memory_space<vmem>>, vector<1x16x4x16xf32>
    %58 = vector.shape_cast %57 : vector<1x16x4x16xf32> to vector<16x4x16xf32>
    %59 = vector.shape_cast %56 : vector<16x4x16xf32> to vector<1x16x4x16xf32>
    tpu.vector_store %arg5[%c0_45, %c0_46, %c0_47, %c0_48], %59 {strides = array<i32>} : memref<1x16x4x16xf32, #tpu.memory_space<vmem>>, vector<1x16x4x16xf32>,
    return
  }
  func.func @transform_0(%arg0: i32, %arg1: i32, %arg2: i32) -> (i32, i32, i32, i32) {
    %c0_i32 = arith.constant 0 : i32
    %c0_i32_0 = arith.constant 0 : i32
    %c0_i32_1 = arith.constant 0 : i32
    %c0_i32_2 = arith.constant 0 : i32
    return %arg0, %c0_i32, %c0_i32_0, %c0_i32_1 : i32, i32, i32, i32
  }
  func.func @transform_1(%arg0: i32, %arg1: i32, %arg2: i32) -> (i32, i32, i32, i32, i32) {
    %c0_i32 = arith.constant 0 : i32
    %c0_i32_0 = arith.constant 0 : i32
    %c0_i32_1 = arith.constant 0 : i32
    %c0_i32_2 = arith.constant 0 : i32
    return %arg0, %c0_i32, %arg2, %c0_i32_0, %c0_i32_1 : i32, i32, i32, i32, i32
  }
  func.func @transform_2(%arg0: i32, %arg1: i32, %arg2: i32) -> (i32, i32, i32, i32) {
    %c0_i32 = arith.constant 0 : i32
    %c0_i32_0 = arith.constant 0 : i32
    %c0_i32_1 = arith.constant 0 : i32
    return %arg0, %arg2, %c0_i32, %c0_i32_0 : i32, i32, i32, i32
  }
}

</mosaic_0001>

<llo_original>
// kernel: tpu_custom_call.1
$region0: #{tpu_custom_call.1}
  #allocation0 [shape = 'u32[]', space=smem, size = 0x4, offset = 0x4, fixed_abs, tag = 'smem constant byte address 0x4 - core index']
  #allocation1 [shape = 'u32[144,128]{1,0:T(1,128)}', space=vmem, size = 0x12000, scoped, tag = 'internal scratch']
  %s0 = inlined_call_operand.hbm [shape: f32[2,18,4,18], index: 0, kind: input, shape index: {}]
  %s1 = inlined_call_operand.hbm [shape: f32[2,9,16,4,16], index: 1, kind: input, shape index: {}]
  %s2 = inlined_call_operand.hbm [shape: f32[2,16,4,16], index: 2, kind: output, shape index: {}]
  %s3 = sld [smem:[#allocation0]]
  $region49: #{tpu_custom_call.1} parent=0
    _
  %s5 = ssub.s32 1, %s3
  %s6 = scalar_select 0, %s5, %s3
  $region1: #{tpu_custom_call.1} parent=0
    #allocation2 [shape = 'u8[73728]{0}', space=vmem, size = 0x12000, scoped, tag = 'input window, operand 0']
    #allocation3 [shape = 's32[2]{0}', space=sflag, size = 0x8, scoped, tag = 'scoped memory for tpu_custom_call.1']
    #allocation4 [shape = 's32[2]{0}', space=sflag, size = 0x8, scoped, tag = 'scoped memory for tpu_custom_call.1']
    #allocation5 [shape = 'u8[589824]{0}', space=vmem, size = 0x90000, scoped, tag = 'input window, operand 1']
    #allocation6 [shape = 's32[2]{0}', space=sflag, size = 0x8, scoped, tag = 'scoped memory for tpu_custom_call.1']
    #allocation7 [shape = 'u8[65536]{0}', space=vmem, size = 0x10000, scoped, tag = 'output window, operand 0']
    %7 = vsyncpa [#allocation3], 0
    %s8 = scalar_lea.sflag [#allocation3], 1
    %9 = vsyncpa %s8, 0
    %10 = vsyncpa [#allocation6], 0
    %s11 = scalar_lea.sflag [#allocation6], 1
    %12 = vsyncpa %s11, 0
    %13 = vsyncpa [#allocation4], 0
    %s14 = scalar_lea.sflag [#allocation4], 1
    %15 = vsyncpa %s14, 0
    loop: start=0, step=1, limit=4
    $region2: #{tpu_custom_call.1} parent=1 // loop_pre_header
      _
    $region3: #{tpu_custom_call.1} parent=1 // loop_header
      %s17 = sphi 0, %s21
      %p18 = scmp.ge.s32.totalorder %s17, 4
      %s24 = sphi 0, %s43
      %s25 = sphi 0, %s39
      %s26 = sphi 0, %s35
      %s27 = sphi 0, %s24
      %s28 = sphi 0, %s25
      %s29 = sphi 0, %s26
      %s30 = sphi 0, %s27
      %s31 = sphi 0, %s28
      %s32 = sphi 0, %s29
      %s46 = sphi 0, %s48
      %s49 = sphi 0, %s46
      %s50 = sphi 0, %s49
      %s66 = sphi 0, %s50
      %s74 = sphi 0, %s76
      %s77 = sphi 0, %s74
      %s78 = sphi 0, %s77
      %s94 = sphi 0, %s78
      %s102 = sphi 0, %s104
      %s105 = sphi 0, %s102
      %s106 = sphi 0, %s105
      %s122 = sphi 0, %s106
    $region4: #{tpu_custom_call.1} parent=1 // loop_header_branch
      %20 = sbr.rel (%p18) target = $region8
    $region5: #{tpu_custom_call.1} parent=1 // loop_body
      %s22 = ssub.s32 %s17, 1
      %s23 = ssub.s32 %s17, 2
      %s33 = sadd.s32 1, %s26
      %p34 = scmp.ge.s32.totalorder %s33, 1
      %s35 = scalar_select %p34, 0, %s33
      %s36 = sadd.s32 1, %s25
      %s37 = scalar_select %p34, %s36, %s25
      %p38 = scmp.ge.s32.totalorder %s37, 1
      %s39 = scalar_select %p38, 0, %s37
      %s40 = sadd.s32 1, %s24
      %s41 = scalar_select %p38, %s40, %s24
      %p42 = scmp.ge.s32.totalorder %s41, 2
      %s43 = scalar_select %p42, 0, %s41
      %s44 = ssub.s32 %s24, %s43
      %p45 = scmp.eq.s32.totalorder %s44, 0
      %s47 = sadd.s32 %s46, 1
      %s48 = scalar_select %p45, %s46, %s47
      %p51 = pneg %p45
      %p52 = scmp.eq.s32.totalorder %s17, 1
      %p53 = por %p51, %p52
      %p54 = scmp.ne.s32.totalorder %s46, %s49
      %p55 = scmp.eq.s32.totalorder %s17, 0
      %p56 = por %p54, %p55
      %p57 = scmp.ne.s32.totalorder %s46, %s49
      %p58 = scmp.eq.s32.totalorder %s22, 1
      %p59 = por %p57, %p58
      %p60 = scmp.ne.s32.totalorder %s49, %s50
      %p61 = scmp.eq.s32.totalorder %s22, 0
      %p62 = por %p60, %p61
      %p63 = scmp.ne.s32.totalorder %s49, %s50
      %p64 = scmp.eq.s32.totalorder %s23, 1
      %p65 = por %p63, %p64
      %p67 = scmp.ne.s32.totalorder %s50, %s66
      %p68 = scmp.eq.s32.totalorder %s23, 0
      %p69 = por %p67, %p68
      %s70 = ssub.s32 %s24, %s43
      %s71 = ssub.s32 %s26, %s35
      %s72 = sor.u32 %s70, %s71
      %p73 = scmp.eq.s32.totalorder %s72, 0
      %s75 = sadd.s32 %s74, 1
      %s76 = scalar_select %p73, %s74, %s75
      %p79 = pneg %p73
      %p80 = scmp.eq.s32.totalorder %s17, 1
      %p81 = por %p79, %p80
      %p82 = scmp.ne.s32.totalorder %s74, %s77
      %p83 = scmp.eq.s32.totalorder %s17, 0
      %p84 = por %p82, %p83
      %p85 = scmp.ne.s32.totalorder %s74, %s77
      %p86 = scmp.eq.s32.totalorder %s22, 1
      %p87 = por %p85, %p86
      %p88 = scmp.ne.s32.totalorder %s77, %s78
      %p89 = scmp.eq.s32.totalorder %s22, 0
      %p90 = por %p88, %p89
      %p91 = scmp.ne.s32.totalorder %s77, %s78
      %p92 = scmp.eq.s32.totalorder %s23, 1
      %p93 = por %p91, %p92
      %p95 = scmp.ne.s32.totalorder %s78, %s94
      %p96 = scmp.eq.s32.totalorder %s23, 0
      %p97 = por %p95, %p96
      %s98 = ssub.s32 %s24, %s43
      %s99 = ssub.s32 %s26, %s35
      %s100 = sor.u32 %s98, %s99
      %p101 = scmp.eq.s32.totalorder %s100, 0
      %s103 = sadd.s32 %s102, 1
      %s104 = scalar_select %p101, %s102, %s103
      %p107 = pneg %p101
      %p108 = scmp.eq.s32.totalorder %s17, 1
      %p109 = por %p107, %p108
      %p110 = scmp.ne.s32.totalorder %s102, %s105
      %p111 = scmp.eq.s32.totalorder %s17, 0
      %p112 = por %p110, %p111
      %p113 = scmp.ne.s32.totalorder %s102, %s105
      %p114 = scmp.eq.s32.totalorder %s22, 1
      %p115 = por %p113, %p114
      %p116 = scmp.ne.s32.totalorder %s105, %s106
      %p117 = scmp.eq.s32.totalorder %s22, 0
      %p118 = por %p116, %p117
      %p119 = scmp.ne.s32.totalorder %s105, %s106
      %p120 = scmp.eq.s32.totalorder %s23, 1
      %p121 = por %p119, %p120
      %p123 = scmp.ne.s32.totalorder %s106, %s122
      %p124 = scmp.eq.s32.totalorder %s23, 0
      %p125 = por %p123, %p124
      %p126 = scmp.le.s32.totalorder 1, %s17
      %p127 = scmp.lt.s32.totalorder %s17, 3
      %p128 = pnand %p126, %p127
      %p129 = pneg %p128
      // Predicated region
      $region9: #{tpu_custom_call.1} parent=5 // pred_check
        _
      $region10: #{tpu_custom_call.1} parent=5 // pred_check_branch
        %131 = sbr.rel (%p128) target = $region12
      $region11: #{tpu_custom_call.1} parent=5 // pred_region
        %s132 = ssub.s32 %s17, 1
      $region12: #{tpu_custom_call.1} parent=5 // pred_fallthru
        _
      %p133 = scmp.lt.s32.totalorder %s17, 2
      // Predicated region
      $region13: #{tpu_custom_call.1} parent=5 // pred_check
        %p134 = pneg %p133
      $region14: #{tpu_custom_call.1} parent=5 // pred_check_branch
        %136 = sbr.rel (%p134) target = $region16
      $region15: #{tpu_custom_call.1} parent=5 // pred_region
        // Predicated region
        $region17: #{tpu_custom_call.1} parent=15 // pred_check
          %p137 = pneg %p56
        $region18: #{tpu_custom_call.1} parent=15 // pred_check_branch
          %139 = sbr.rel (%p137) target = $region20
        $region19: #{tpu_custom_call.1} parent=15 // pred_region
          %s140 = sand.u32 %s46, 1
          %s141 = scalar_lea.sflag [#allocation3], %s140
          %s142 = sand.u32 %s46, 1
          %s143 = smul.addr %s142, 72
          %s144 = scalar_lea.vmem [#allocation2], %s143
          %s146 = ssub.s32 1152, 1152
          %147 = vsyncadd %s141, %s146
          %s148 = smul.addr %s24, 18
          %s149 = smul.addr %s148, 64
          %s150 = scalar_lea.hbm %s0, %s149
          %s151 = sshll.u32 %s144, 4
          %s152 = int_to_ptr.vmem [resolvable:$true] %s151
          %157 = dma.hbm_to_vmem [thread:$0]  %s150, 1152, %s152, %s141, 64, 64, 4
        $region20: #{tpu_custom_call.1} parent=15 // pred_fallthru
          _
        // Predicated region
        $region21: #{tpu_custom_call.1} parent=15 // pred_check
          %p158 = pneg %p84
        $region22: #{tpu_custom_call.1} parent=15 // pred_check_branch
          %160 = sbr.rel (%p158) target = $region24
        $region23: #{tpu_custom_call.1} parent=15 // pred_region
          %s161 = sand.u32 %s74, 1
          %s162 = scalar_lea.sflag [#allocation6], %s161
          %s163 = sand.u32 %s74, 1
          %s164 = smul.addr %s163, 576
          %s165 = scalar_lea.vmem [#allocation5], %s164
          %s166 = smul.u32 16, %s26
          %s168 = ssub.s32 9216, 9216
          %169 = vsyncadd %s162, %s168
          %s170 = smul.addr %s24, 144
          %s171 = sadd.s32 %s166, %s170
          %s172 = smul.addr %s171, 64
          %s173 = scalar_lea.hbm %s1, %s172
          %s174 = sshll.u32 %s165, 4
          %s175 = int_to_ptr.vmem [resolvable:$true] %s174
          %180 = dma.hbm_to_vmem [thread:$0]  %s173, 9216, %s175, %s162, 64, 64, 4
        $region24: #{tpu_custom_call.1} parent=15 // pred_fallthru
          _
      $region16: #{tpu_custom_call.1} parent=5 // pred_fallthru
        _
      %p181 = scmp.le.s32.totalorder 1, %s17
      %p182 = scmp.lt.s32.totalorder %s17, 3
      %p183 = pnand %p181, %p182
      %p184 = pneg %p183
      // Predicated region
      $region25: #{tpu_custom_call.1} parent=5 // pred_check
        _
      $region26: #{tpu_custom_call.1} parent=5 // pred_check_branch
        %186 = sbr.rel (%p183) target = $region28
      $region27: #{tpu_custom_call.1} parent=5 // pred_region
        %s187 = ssub.s32 %s17, 1
        %s188 = sand.u32 %s49, 1
        %s189 = scalar_lea.sflag [#allocation3], %s188
        %s190 = sand.u32 %s49, 1
        %s191 = smul.addr %s190, 72
        %s192 = scalar_lea.vmem [#allocation2], %s191
        // Predicated region
        $region29: #{tpu_custom_call.1} parent=27 // pred_check
          %p193 = pneg %p62
        $region30: #{tpu_custom_call.1} parent=27 // pred_check_branch
          %195 = sbr.rel (%p193) target = $region32
        $region31: #{tpu_custom_call.1} parent=27 // pred_region
          %196 = dma.done %s189, 1152
        $region32: #{tpu_custom_call.1} parent=27 // pred_fallthru
          _
        %s197 = sand.u32 %s77, 1
        %s198 = scalar_lea.sflag [#allocation6], %s197
        %s199 = sand.u32 %s77, 1
        %s200 = smul.addr %s199, 576
        %s201 = scalar_lea.vmem [#allocation5], %s200
        // Predicated region
        $region33: #{tpu_custom_call.1} parent=27 // pred_check
          %p202 = pneg %p90
        $region34: #{tpu_custom_call.1} parent=27 // pred_check_branch
          %204 = sbr.rel (%p202) target = $region36
        $region35: #{tpu_custom_call.1} parent=27 // pred_region
          %205 = dma.done %s198, 9216
        $region36: #{tpu_custom_call.1} parent=27 // pred_fallthru
          _
        %s206 = sand.u32 %s49, 1
        %s207 = scalar_lea.sflag [#allocation3], %s206
        %s208 = sand.u32 %s49, 1
        %s209 = smul.addr %s208, 72
        %s210 = scalar_lea.vmem [#allocation2], %s209
        %p211 = pneg %p62
        %p212 = pneg %p59
        %s213 = sand.u32 %s77, 1
        %s214 = scalar_lea.sflag [#allocation6], %s213
        %s215 = sand.u32 %s77, 1
        %s216 = smul.addr %s215, 576
        %s217 = scalar_lea.vmem [#allocation5], %s216
        %p218 = pneg %p90
        %p219 = pneg %p87
        %p220 = pneg %p118
        %p221 = pneg %p115
        %s222 = sand.u32 %s105, 1
        %s223 = scalar_lea.sflag [#allocation4], %s222
        %s224 = sand.u32 %s105, 1
        %s225 = smul.addr %s224, 64
        %s226 = scalar_lea.vmem [#allocation7], %s225
        %s227 = smul.u32 16, %s29
        %s228 = smul.u32 16, %s29
        %s229 = smul.u32 %s29, 16
        %s230 = smul.u32 %s229, 4
        %s231 = scalar_lea.vmem %s192, %s230 [#allocation2]
        %v232 = vld [vmem:[%s231] sm:$0xf]
        %v233 = vld [vmem:[%s231 + $0x4] sm:$0xf]
        %v234 = vld [vmem:[%s231 + $0x8] sm:$0xf]
        %v235 = vld [vmem:[%s231 + $0xc] sm:$0xf]
        %v236 = vld [vmem:[%s231 + $0x10] sm:$0xf]
        %v237 = vld [vmem:[%s231 + $0x14] sm:$0xf]
        %v238 = vld [vmem:[%s231 + $0x18] sm:$0xf]
        %v239 = vld [vmem:[%s231 + $0x1c] sm:$0xf]
        %v240 = vld [vmem:[%s231 + $0x20] sm:$0xf]
        %v241 = vld [vmem:[%s231 + $0x24] sm:$0xf]
        %v242 = vld [vmem:[%s231 + $0x28] sm:$0xf]
        %v243 = vld [vmem:[%s231 + $0x2c] sm:$0xf]
        %v244 = vld [vmem:[%s231 + $0x30] sm:$0xf]
        %v245 = vld [vmem:[%s231 + $0x34] sm:$0xf]
        %v246 = vld [vmem:[%s231 + $0x38] sm:$0xf]
        %v247 = vld [vmem:[%s231 + $0x3c] sm:$0xf]
        %v248 = vld [vmem:[%s231 + $0x40] sm:$0xf]
        %v249 = vld [vmem:[%s231 + $0x44] sm:$0xf]
        %v250 = vld [vmem:[%s201] sm:$0xf]
        %v251 = vld [vmem:[%s201 + $0x4] sm:$0xf]
        %v252 = vld [vmem:[%s201 + $0x8] sm:$0xf]
        %v253 = vld [vmem:[%s201 + $0xc] sm:$0xf]
        %v254 = vld [vmem:[%s201 + $0x10] sm:$0xf]
        %v255 = vld [vmem:[%s201 + $0x14] sm:$0xf]
        %v256 = vld [vmem:[%s201 + $0x18] sm:$0xf]
        %v257 = vld [vmem:[%s201 + $0x1c] sm:$0xf]
        %v258 = vld [vmem:[%s201 + $0x20] sm:$0xf]
        %v259 = vld [vmem:[%s201 + $0x24] sm:$0xf]
        %v260 = vld [vmem:[%s201 + $0x28] sm:$0xf]
        %v261 = vld [vmem:[%s201 + $0x2c] sm:$0xf]
        %v262 = vld [vmem:[%s201 + $0x30] sm:$0xf]
        %v263 = vld [vmem:[%s201 + $0x34] sm:$0xf]
        %v264 = vld [vmem:[%s201 + $0x38] sm:$0xf]
        %v265 = vld [vmem:[%s201 + $0x3c] sm:$0xf]
        %v266 = vmul.f32 %v250, %v232
        %v267 = vmul.f32 %v251, %v233
        %v268 = vmul.f32 %v252, %v234
        %v269 = vmul.f32 %v253, %v235
        %v270 = vmul.f32 %v254, %v236
        %v271 = vmul.f32 %v255, %v237
        %v272 = vmul.f32 %v256, %v238
        %v273 = vmul.f32 %v257, %v239
        %v274 = vmul.f32 %v258, %v240
        %v275 = vmul.f32 %v259, %v241
        %v276 = vmul.f32 %v260, %v242
        %v277 = vmul.f32 %v261, %v243
        %v278 = vmul.f32 %v262, %v244
        %v279 = vmul.f32 %v263, %v245
        %v280 = vmul.f32 %v264, %v246
        %v281 = vmul.f32 %v265, %v247
        %v282 = vadd.f32 %v266, 0.0
        %v283 = vadd.f32 %v267, 0.0
        %v284 = vadd.f32 %v268, 0.0
        %v285 = vadd.f32 %v269, 0.0
        %v286 = vadd.f32 %v270, 0.0
        %v287 = vadd.f32 %v271, 0.0
        %v288 = vadd.f32 %v272, 0.0
        %v289 = vadd.f32 %v273, 0.0
        %v290 = vadd.f32 %v274, 0.0
        %v291 = vadd.f32 %v275, 0.0
        %v292 = vadd.f32 %v276, 0.0
        %v293 = vadd.f32 %v277, 0.0
        %v294 = vadd.f32 %v278, 0.0
        %v295 = vadd.f32 %v279, 0.0
        %v296 = vadd.f32 %v280, 0.0
        %v297 = vadd.f32 %v281, 0.0
        %s298 = scalar_lea.vmem %s201, 192 [#allocation5]
        %v299 = vld [vmem:[%s298] sm:$0xf]
        %v300 = vld [vmem:[%s298 + $0x4] sm:$0xf]
        %v301 = vld [vmem:[%s298 + $0x8] sm:$0xf]
        %v302 = vld [vmem:[%s298 + $0xc] sm:$0xf]
        %v303 = vld [vmem:[%s298 + $0x10] sm:$0xf]
        %v304 = vld [vmem:[%s298 + $0x14] sm:$0xf]
        %v305 = vld [vmem:[%s298 + $0x18] sm:$0xf]
        %v306 = vld [vmem:[%s298 + $0x1c] sm:$0xf]
        %v307 = vld [vmem:[%s298 + $0x20] sm:$0xf]
        %v308 = vld [vmem:[%s298 + $0x24] sm:$0xf]
        %v309 = vld [vmem:[%s298 + $0x28] sm:$0xf]
        %v310 = vld [vmem:[%s298 + $0x2c] sm:$0xf]
        %v311 = vld [vmem:[%s298 + $0x30] sm:$0xf]
        %v312 = vld [vmem:[%s298 + $0x34] sm:$0xf]
        %v313 = vld [vmem:[%s298 + $0x38] sm:$0xf]
        %v314 = vld [vmem:[%s298 + $0x3c] sm:$0xf]
        %v315 = vmul.f32 %v299, %v233
        %v316 = vmul.f32 %v300, %v234
        %v317 = vmul.f32 %v301, %v235
        %v318 = vmul.f32 %v302, %v236
        %v319 = vmul.f32 %v303, %v237
        %v320 = vmul.f32 %v304, %v238
        %v321 = vmul.f32 %v305, %v239
        %v322 = vmul.f32 %v306, %v240
        %v323 = vmul.f32 %v307, %v241
        %v324 = vmul.f32 %v308, %v242
        %v325 = vmul.f32 %v309, %v243
        %v326 = vmul.f32 %v310, %v244
        %v327 = vmul.f32 %v311, %v245
        %v328 = vmul.f32 %v312, %v246
        %v329 = vmul.f32 %v313, %v247
        %v330 = vmul.f32 %v314, %v248
        %v331 = vadd.f32 %v282, %v315
        %v332 = vadd.f32 %v283, %v316
        %v333 = vadd.f32 %v284, %v317
        %v334 = vadd.f32 %v285, %v318
        %v335 = vadd.f32 %v286, %v319
        %v336 = vadd.f32 %v287, %v320
        %v337 = vadd.f32 %v288, %v321
        %v338 = vadd.f32 %v289, %v322
        %v339 = vadd.f32 %v290, %v323
        %v340 = vadd.f32 %v291, %v324
        %v341 = vadd.f32 %v292, %v325
        %v342 = vadd.f32 %v293, %v326
        %v343 = vadd.f32 %v294, %v327
        %v344 = vadd.f32 %v295, %v328
        %v345 = vadd.f32 %v296, %v329
        %v346 = vadd.f32 %v297, %v330
        %s347 = scalar_lea.vmem %s201, 384 [#allocation5]
        %v348 = vld [vmem:[%s347] sm:$0xf]
        %v349 = vld [vmem:[%s347 + $0x4] sm:$0xf]
        %v350 = vld [vmem:[%s347 + $0x8] sm:$0xf]
        %v351 = vld [vmem:[%s347 + $0xc] sm:$0xf]
        %v352 = vld [vmem:[%s347 + $0x10] sm:$0xf]
        %v353 = vld [vmem:[%s347 + $0x14] sm:$0xf]
        %v354 = vld [vmem:[%s347 + $0x18] sm:$0xf]
        %v355 = vld [vmem:[%s347 + $0x1c] sm:$0xf]
        %v356 = vld [vmem:[%s347 + $0x20] sm:$0xf]
        %v357 = vld [vmem:[%s347 + $0x24] sm:$0xf]
        %v358 = vld [vmem:[%s347 + $0x28] sm:$0xf]
        %v359 = vld [vmem:[%s347 + $0x2c] sm:$0xf]
        %v360 = vld [vmem:[%s347 + $0x30] sm:$0xf]
        %v361 = vld [vmem:[%s347 + $0x34] sm:$0xf]
        %v362 = vld [vmem:[%s347 + $0x38] sm:$0xf]
        %v363 = vld [vmem:[%s347 + $0x3c] sm:$0xf]
        %v364 = vmul.f32 %v348, %v234
        %v365 = vmul.f32 %v349, %v235
        %v366 = vmul.f32 %v350, %v236
        %v367 = vmul.f32 %v351, %v237
        %v368 = vmul.f32 %v352, %v238
        %v369 = vmul.f32 %v353, %v239
        %v370 = vmul.f32 %v354, %v240
        %v371 = vmul.f32 %v355, %v241
        %v372 = vmul.f32 %v356, %v242
        %v373 = vmul.f32 %v357, %v243
        %v374 = vmul.f32 %v358, %v244
        %v375 = vmul.f32 %v359, %v245
        %v376 = vmul.f32 %v360, %v246
        %v377 = vmul.f32 %v361, %v247
        %v378 = vmul.f32 %v362, %v248
        %v379 = vmul.f32 %v363, %v249
        %v380 = vadd.f32 %v331, %v364
        %v381 = vadd.f32 %v332, %v365
        %v382 = vadd.f32 %v333, %v366
        %v383 = vadd.f32 %v334, %v367
        %v384 = vadd.f32 %v335, %v368
        %v385 = vadd.f32 %v336, %v369
        %v386 = vadd.f32 %v337, %v370
        %v387 = vadd.f32 %v338, %v371
        %v388 = vadd.f32 %v339, %v372
        %v389 = vadd.f32 %v340, %v373
        %v390 = vadd.f32 %v341, %v374
        %v391 = vadd.f32 %v342, %v375
        %v392 = vadd.f32 %v343, %v376
        %v393 = vadd.f32 %v344, %v377
        %v394 = vadd.f32 %v345, %v378
        %v395 = vadd.f32 %v346, %v379
        %s396 = scalar_lea.vmem %s201, 64 [#allocation5]
        %v397 = vld [vmem:[%s396] sm:$0xf]
        %v398 = vld [vmem:[%s396 + $0x4] sm:$0xf]
        %v399 = vld [vmem:[%s396 + $0x8] sm:$0xf]
        %v400 = vld [vmem:[%s396 + $0xc] sm:$0xf]
        %v401 = vld [vmem:[%s396 + $0x10] sm:$0xf]
        %v402 = vld [vmem:[%s396 + $0x14] sm:$0xf]
        %v403 = vld [vmem:[%s396 + $0x18] sm:$0xf]
        %v404 = vld [vmem:[%s396 + $0x1c] sm:$0xf]
        %v405 = vld [vmem:[%s396 + $0x20] sm:$0xf]
        %v406 = vld [vmem:[%s396 + $0x24] sm:$0xf]
        %v407 = vld [vmem:[%s396 + $0x28] sm:$0xf]
        %v408 = vld [vmem:[%s396 + $0x2c] sm:$0xf]
        %v409 = vld [vmem:[%s396 + $0x30] sm:$0xf]
        %v410 = vld [vmem:[%s396 + $0x34] sm:$0xf]
        %v411 = vld [vmem:[%s396 + $0x38] sm:$0xf]
        %v412 = vld [vmem:[%s396 + $0x3c] sm:$0xf]
        %429 = vrot.lane.b32.xlu0 %v232, 127
        %v430 = vpop.permute.xlu0 %429
        %431 = vrot.lane.b32.xlu0 %v233, 127
        %v432 = vpop.permute.xlu0 %431
        %433 = vrot.lane.b32.xlu0 %v234, 127
        %v434 = vpop.permute.xlu0 %433
        %435 = vrot.lane.b32.xlu0 %v235, 127
        %v436 = vpop.permute.xlu0 %435
        %437 = vrot.lane.b32.xlu0 %v236, 127
        %v438 = vpop.permute.xlu0 %437
        %439 = vrot.lane.b32.xlu0 %v237, 127
        %v440 = vpop.permute.xlu0 %439
        %441 = vrot.lane.b32.xlu0 %v238, 127
        %v442 = vpop.permute.xlu0 %441
        %443 = vrot.lane.b32.xlu0 %v239, 127
        %v444 = vpop.permute.xlu0 %443
        %445 = vrot.lane.b32.xlu0 %v240, 127
        %v446 = vpop.permute.xlu0 %445
        %447 = vrot.lane.b32.xlu0 %v241, 127
        %v448 = vpop.permute.xlu0 %447
        %449 = vrot.lane.b32.xlu0 %v242, 127
        %v450 = vpop.permute.xlu0 %449
        %451 = vrot.lane.b32.xlu0 %v243, 127
        %v452 = vpop.permute.xlu0 %451
        %453 = vrot.lane.b32.xlu0 %v244, 127
        %v454 = vpop.permute.xlu0 %453
        %455 = vrot.lane.b32.xlu0 %v245, 127
        %v456 = vpop.permute.xlu0 %455
        %457 = vrot.lane.b32.xlu0 %v246, 127
        %v458 = vpop.permute.xlu0 %457
        %459 = vrot.lane.b32.xlu0 %v247, 127
        %v460 = vpop.permute.xlu0 %459
        %v477 = vmul.f32 %v397, %v430
        %v478 = vmul.f32 %v398, %v432
        %v479 = vmul.f32 %v399, %v434
        %v480 = vmul.f32 %v400, %v436
        %v481 = vmul.f32 %v401, %v438
        %v482 = vmul.f32 %v402, %v440
        %v483 = vmul.f32 %v403, %v442
        %v484 = vmul.f32 %v404, %v444
        %v485 = vmul.f32 %v405, %v446
        %v486 = vmul.f32 %v406, %v448
        %v487 = vmul.f32 %v407, %v450
        %v488 = vmul.f32 %v408, %v452
        %v489 = vmul.f32 %v409, %v454
        %v490 = vmul.f32 %v410, %v456
        %v491 = vmul.f32 %v411, %v458
        %v492 = vmul.f32 %v412, %v460
        %v493 = vadd.f32 %v380, %v477
        %v494 = vadd.f32 %v381, %v478
        %v495 = vadd.f32 %v382, %v479
        %v496 = vadd.f32 %v383, %v480
        %v497 = vadd.f32 %v384, %v481
        %v498 = vadd.f32 %v385, %v482
        %v499 = vadd.f32 %v386, %v483
        %v500 = vadd.f32 %v387, %v484
        %v501 = vadd.f32 %v388, %v485
        %v502 = vadd.f32 %v389, %v486
        %v503 = vadd.f32 %v390, %v487
        %v504 = vadd.f32 %v391, %v488
        %v505 = vadd.f32 %v392, %v489
        %v506 = vadd.f32 %v393, %v490
        %v507 = vadd.f32 %v394, %v491
        %v508 = vadd.f32 %v395, %v492
        %s509 = scalar_lea.vmem %s201, 256 [#allocation5]
        %v510 = vld [vmem:[%s509] sm:$0xf]
        %v511 = vld [vmem:[%s509 + $0x4] sm:$0xf]
        %v512 = vld [vmem:[%s509 + $0x8] sm:$0xf]
        %v513 = vld [vmem:[%s509 + $0xc] sm:$0xf]
        %v514 = vld [vmem:[%s509 + $0x10] sm:$0xf]
        %v515 = vld [vmem:[%s509 + $0x14] sm:$0xf]
        %v516 = vld [vmem:[%s509 + $0x18] sm:$0xf]
        %v517 = vld [vmem:[%s509 + $0x1c] sm:$0xf]
        %v518 = vld [vmem:[%s509 + $0x20] sm:$0xf]
        %v519 = vld [vmem:[%s509 + $0x24] sm:$0xf]
        %v520 = vld [vmem:[%s509 + $0x28] sm:$0xf]
        %v521 = vld [vmem:[%s509 + $0x2c] sm:$0xf]
        %v522 = vld [vmem:[%s509 + $0x30] sm:$0xf]
        %v523 = vld [vmem:[%s509 + $0x34] sm:$0xf]
        %v524 = vld [vmem:[%s509 + $0x38] sm:$0xf]
        %v525 = vld [vmem:[%s509 + $0x3c] sm:$0xf]
        %527 = vrot.lane.b32.xlu0 %v248, 127
        %v528 = vpop.permute.xlu0 %527
        %v530 = vmul.f32 %v510, %v432
        %v531 = vmul.f32 %v511, %v434
        %v532 = vmul.f32 %v512, %v436
        %v533 = vmul.f32 %v513, %v438
        %v534 = vmul.f32 %v514, %v440
        %v535 = vmul.f32 %v515, %v442
        %v536 = vmul.f32 %v516, %v444
        %v537 = vmul.f32 %v517, %v446
        %v538 = vmul.f32 %v518, %v448
        %v539 = vmul.f32 %v519, %v450
        %v540 = vmul.f32 %v520, %v452
        %v541 = vmul.f32 %v521, %v454
        %v542 = vmul.f32 %v522, %v456
        %v543 = vmul.f32 %v523, %v458
        %v544 = vmul.f32 %v524, %v460
        %v545 = vmul.f32 %v525, %v528
        %v546 = vadd.f32 %v493, %v530
        %v547 = vadd.f32 %v494, %v531
        %v548 = vadd.f32 %v495, %v532
        %v549 = vadd.f32 %v496, %v533
        %v550 = vadd.f32 %v497, %v534
        %v551 = vadd.f32 %v498, %v535
        %v552 = vadd.f32 %v499, %v536
        %v553 = vadd.f32 %v500, %v537
        %v554 = vadd.f32 %v501, %v538
        %v555 = vadd.f32 %v502, %v539
        %v556 = vadd.f32 %v503, %v540
        %v557 = vadd.f32 %v504, %v541
        %v558 = vadd.f32 %v505, %v542
        %v559 = vadd.f32 %v506, %v543
        %v560 = vadd.f32 %v507, %v544
        %v561 = vadd.f32 %v508, %v545
        %s562 = scalar_lea.vmem %s201, 448 [#allocation5]
        %v563 = vld [vmem:[%s562] sm:$0xf]
        %v564 = vld [vmem:[%s562 + $0x4] sm:$0xf]
        %v565 = vld [vmem:[%s562 + $0x8] sm:$0xf]
        %v566 = vld [vmem:[%s562 + $0xc] sm:$0xf]
        %v567 = vld [vmem:[%s562 + $0x10] sm:$0xf]
        %v568 = vld [vmem:[%s562 + $0x14] sm:$0xf]
        %v569 = vld [vmem:[%s562 + $0x18] sm:$0xf]
        %v570 = vld [vmem:[%s562 + $0x1c] sm:$0xf]
        %v571 = vld [vmem:[%s562 + $0x20] sm:$0xf]
        %v572 = vld [vmem:[%s562 + $0x24] sm:$0xf]
        %v573 = vld [vmem:[%s562 + $0x28] sm:$0xf]
        %v574 = vld [vmem:[%s562 + $0x2c] sm:$0xf]
        %v575 = vld [vmem:[%s562 + $0x30] sm:$0xf]
        %v576 = vld [vmem:[%s562 + $0x34] sm:$0xf]
        %v577 = vld [vmem:[%s562 + $0x38] sm:$0xf]
        %v578 = vld [vmem:[%s562 + $0x3c] sm:$0xf]
        %580 = vrot.lane.b32.xlu0 %v249, 127
        %v581 = vpop.permute.xlu0 %580
        %v583 = vmul.f32 %v563, %v434
        %v584 = vmul.f32 %v564, %v436
        %v585 = vmul.f32 %v565, %v438
        %v586 = vmul.f32 %v566, %v440
        %v587 = vmul.f32 %v567, %v442
        %v588 = vmul.f32 %v568, %v444
        %v589 = vmul.f32 %v569, %v446
        %v590 = vmul.f32 %v570, %v448
        %v591 = vmul.f32 %v571, %v450
        %v592 = vmul.f32 %v572, %v452
        %v593 = vmul.f32 %v573, %v454
        %v594 = vmul.f32 %v574, %v456
        %v595 = vmul.f32 %v575, %v458
        %v596 = vmul.f32 %v576, %v460
        %v597 = vmul.f32 %v577, %v528
        %v598 = vmul.f32 %v578, %v581
        %v599 = vadd.f32 %v546, %v583
        %v600 = vadd.f32 %v547, %v584
        %v601 = vadd.f32 %v548, %v585
        %v602 = vadd.f32 %v549, %v586
        %v603 = vadd.f32 %v550, %v587
        %v604 = vadd.f32 %v551, %v588
        %v605 = vadd.f32 %v552, %v589
        %v606 = vadd.f32 %v553, %v590
        %v607 = vadd.f32 %v554, %v591
        %v608 = vadd.f32 %v555, %v592
        %v609 = vadd.f32 %v556, %v593
        %v610 = vadd.f32 %v557, %v594
        %v611 = vadd.f32 %v558, %v595
        %v612 = vadd.f32 %v559, %v596
        %v613 = vadd.f32 %v560, %v597
        %v614 = vadd.f32 %v561, %v598
        %s615 = scalar_lea.vmem %s201, 128 [#allocation5]
        %v616 = vld [vmem:[%s615] sm:$0xf]
        %v617 = vld [vmem:[%s615 + $0x4] sm:$0xf]
        %v618 = vld [vmem:[%s615 + $0x8] sm:$0xf]
        %v619 = vld [vmem:[%s615 + $0xc] sm:$0xf]
        %v620 = vld [vmem:[%s615 + $0x10] sm:$0xf]
        %v621 = vld [vmem:[%s615 + $0x14] sm:$0xf]
        %v622 = vld [vmem:[%s615 + $0x18] sm:$0xf]
        %v623 = vld [vmem:[%s615 + $0x1c] sm:$0xf]
        %v624 = vld [vmem:[%s615 + $0x20] sm:$0xf]
        %v625 = vld [vmem:[%s615 + $0x24] sm:$0xf]
        %v626 = vld [vmem:[%s615 + $0x28] sm:$0xf]
        %v627 = vld [vmem:[%s615 + $0x2c] sm:$0xf]
        %v628 = vld [vmem:[%s615 + $0x30] sm:$0xf]
        %v629 = vld [vmem:[%s615 + $0x34] sm:$0xf]
        %v630 = vld [vmem:[%s615 + $0x38] sm:$0xf]
        %v631 = vld [vmem:[%s615 + $0x3c] sm:$0xf]
        %632 = vrot.lane.b32.xlu0 %v232, 126
        %v633 = vpop.permute.xlu0 %632
        %634 = vrot.lane.b32.xlu0 %v233, 126
        %v635 = vpop.permute.xlu0 %634
        %636 = vrot.lane.b32.xlu0 %v234, 126
        %v637 = vpop.permute.xlu0 %636
        %638 = vrot.lane.b32.xlu0 %v235, 126
        %v639 = vpop.permute.xlu0 %638
        %640 = vrot.lane.b32.xlu0 %v236, 126
        %v641 = vpop.permute.xlu0 %640
        %642 = vrot.lane.b32.xlu0 %v237, 126
        %v643 = vpop.permute.xlu0 %642
        %644 = vrot.lane.b32.xlu0 %v238, 126
        %v645 = vpop.permute.xlu0 %644
        %646 = vrot.lane.b32.xlu0 %v239, 126
        %v647 = vpop.permute.xlu0 %646
        %648 = vrot.lane.b32.xlu0 %v240, 126
        %v649 = vpop.permute.xlu0 %648
        %650 = vrot.lane.b32.xlu0 %v241, 126
        %v651 = vpop.permute.xlu0 %650
        %652 = vrot.lane.b32.xlu0 %v242, 126
        %v653 = vpop.permute.xlu0 %652
        %654 = vrot.lane.b32.xlu0 %v243, 126
        %v655 = vpop.permute.xlu0 %654
        %656 = vrot.lane.b32.xlu0 %v244, 126
        %v657 = vpop.permute.xlu0 %656
        %658 = vrot.lane.b32.xlu0 %v245, 126
        %v659 = vpop.permute.xlu0 %658
        %660 = vrot.lane.b32.xlu0 %v246, 126
        %v661 = vpop.permute.xlu0 %660
        %662 = vrot.lane.b32.xlu0 %v247, 126
        %v663 = vpop.permute.xlu0 %662
        %v680 = vmul.f32 %v616, %v633
        %v681 = vmul.f32 %v617, %v635
        %v682 = vmul.f32 %v618, %v637
        %v683 = vmul.f32 %v619, %v639
        %v684 = vmul.f32 %v620, %v641
        %v685 = vmul.f32 %v621, %v643
        %v686 = vmul.f32 %v622, %v645
        %v687 = vmul.f32 %v623, %v647
        %v688 = vmul.f32 %v624, %v649
        %v689 = vmul.f32 %v625, %v651
        %v690 = vmul.f32 %v626, %v653
        %v691 = vmul.f32 %v627, %v655
        %v692 = vmul.f32 %v628, %v657
        %v693 = vmul.f32 %v629, %v659
        %v694 = vmul.f32 %v630, %v661
        %v695 = vmul.f32 %v631, %v663
        %v696 = vadd.f32 %v599, %v680
        %v697 = vadd.f32 %v600, %v681
        %v698 = vadd.f32 %v601, %v682
        %v699 = vadd.f32 %v602, %v683
        %v700 = vadd.f32 %v603, %v684
        %v701 = vadd.f32 %v604, %v685
        %v702 = vadd.f32 %v605, %v686
        %v703 = vadd.f32 %v606, %v687
        %v704 = vadd.f32 %v607, %v688
        %v705 = vadd.f32 %v608, %v689
        %v706 = vadd.f32 %v609, %v690
        %v707 = vadd.f32 %v610, %v691
        %v708 = vadd.f32 %v611, %v692
        %v709 = vadd.f32 %v612, %v693
        %v710 = vadd.f32 %v613, %v694
        %v711 = vadd.f32 %v614, %v695
        %s712 = scalar_lea.vmem %s201, 320 [#allocation5]
        %v713 = vld [vmem:[%s712] sm:$0xf]
        %v714 = vld [vmem:[%s712 + $0x4] sm:$0xf]
        %v715 = vld [vmem:[%s712 + $0x8] sm:$0xf]
        %v716 = vld [vmem:[%s712 + $0xc] sm:$0xf]
        %v717 = vld [vmem:[%s712 + $0x10] sm:$0xf]
        %v718 = vld [vmem:[%s712 + $0x14] sm:$0xf]
        %v719 = vld [vmem:[%s712 + $0x18] sm:$0xf]
        %v720 = vld [vmem:[%s712 + $0x1c] sm:$0xf]
        %v721 = vld [vmem:[%s712 + $0x20] sm:$0xf]
        %v722 = vld [vmem:[%s712 + $0x24] sm:$0xf]
        %v723 = vld [vmem:[%s712 + $0x28] sm:$0xf]
        %v724 = vld [vmem:[%s712 + $0x2c] sm:$0xf]
        %v725 = vld [vmem:[%s712 + $0x30] sm:$0xf]
        %v726 = vld [vmem:[%s712 + $0x34] sm:$0xf]
        %v727 = vld [vmem:[%s712 + $0x38] sm:$0xf]
        %v728 = vld [vmem:[%s712 + $0x3c] sm:$0xf]
        %729 = vrot.lane.b32.xlu0 %v248, 126
        %v730 = vpop.permute.xlu0 %729
        %v732 = vmul.f32 %v713, %v635
        %v733 = vmul.f32 %v714, %v637
        %v734 = vmul.f32 %v715, %v639
        %v735 = vmul.f32 %v716, %v641
        %v736 = vmul.f32 %v717, %v643
        %v737 = vmul.f32 %v718, %v645
        %v738 = vmul.f32 %v719, %v647
        %v739 = vmul.f32 %v720, %v649
        %v740 = vmul.f32 %v721, %v651
        %v741 = vmul.f32 %v722, %v653
        %v742 = vmul.f32 %v723, %v655
        %v743 = vmul.f32 %v724, %v657
        %v744 = vmul.f32 %v725, %v659
        %v745 = vmul.f32 %v726, %v661
        %v746 = vmul.f32 %v727, %v663
        %v747 = vmul.f32 %v728, %v730
        %v748 = vadd.f32 %v696, %v732
        %v749 = vadd.f32 %v697, %v733
        %v750 = vadd.f32 %v698, %v734
        %v751 = vadd.f32 %v699, %v735
        %v752 = vadd.f32 %v700, %v736
        %v753 = vadd.f32 %v701, %v737
        %v754 = vadd.f32 %v702, %v738
        %v755 = vadd.f32 %v703, %v739
        %v756 = vadd.f32 %v704, %v740
        %v757 = vadd.f32 %v705, %v741
        %v758 = vadd.f32 %v706, %v742
        %v759 = vadd.f32 %v707, %v743
        %v760 = vadd.f32 %v708, %v744
        %v761 = vadd.f32 %v709, %v745
        %v762 = vadd.f32 %v710, %v746
        %v763 = vadd.f32 %v711, %v747
        %s764 = scalar_lea.vmem %s201, 512 [#allocation5]
        %v765 = vld [vmem:[%s764] sm:$0xf]
        %v766 = vld [vmem:[%s764 + $0x4] sm:$0xf]
        %v767 = vld [vmem:[%s764 + $0x8] sm:$0xf]
        %v768 = vld [vmem:[%s764 + $0xc] sm:$0xf]
        %v769 = vld [vmem:[%s764 + $0x10] sm:$0xf]
        %v770 = vld [vmem:[%s764 + $0x14] sm:$0xf]
        %v771 = vld [vmem:[%s764 + $0x18] sm:$0xf]
        %v772 = vld [vmem:[%s764 + $0x1c] sm:$0xf]
        %v773 = vld [vmem:[%s764 + $0x20] sm:$0xf]
        %v774 = vld [vmem:[%s764 + $0x24] sm:$0xf]
        %v775 = vld [vmem:[%s764 + $0x28] sm:$0xf]
        %v776 = vld [vmem:[%s764 + $0x2c] sm:$0xf]
        %v777 = vld [vmem:[%s764 + $0x30] sm:$0xf]
        %v778 = vld [vmem:[%s764 + $0x34] sm:$0xf]
        %v779 = vld [vmem:[%s764 + $0x38] sm:$0xf]
        %v780 = vld [vmem:[%s764 + $0x3c] sm:$0xf]
        %781 = vrot.lane.b32.xlu0 %v249, 126
        %v782 = vpop.permute.xlu0 %781
        %v784 = vmul.f32 %v765, %v637
        %v785 = vmul.f32 %v766, %v639
        %v786 = vmul.f32 %v767, %v641
        %v787 = vmul.f32 %v768, %v643
        %v788 = vmul.f32 %v769, %v645
        %v789 = vmul.f32 %v770, %v647
        %v790 = vmul.f32 %v771, %v649
        %v791 = vmul.f32 %v772, %v651
        %v792 = vmul.f32 %v773, %v653
        %v793 = vmul.f32 %v774, %v655
        %v794 = vmul.f32 %v775, %v657
        %v795 = vmul.f32 %v776, %v659
        %v796 = vmul.f32 %v777, %v661
        %v797 = vmul.f32 %v778, %v663
        %v798 = vmul.f32 %v779, %v730
        %v799 = vmul.f32 %v780, %v782
        %v800 = vadd.f32 %v748, %v784
        %v801 = vadd.f32 %v749, %v785
        %v802 = vadd.f32 %v750, %v786
        %v803 = vadd.f32 %v751, %v787
        %v804 = vadd.f32 %v752, %v788
        %v805 = vadd.f32 %v753, %v789
        %v806 = vadd.f32 %v754, %v790
        %v807 = vadd.f32 %v755, %v791
        %v808 = vadd.f32 %v756, %v792
        %v809 = vadd.f32 %v757, %v793
        %v810 = vadd.f32 %v758, %v794
        %v811 = vadd.f32 %v759, %v795
        %v812 = vadd.f32 %v760, %v796
        %v813 = vadd.f32 %v761, %v797
        %v814 = vadd.f32 %v762, %v798
        %v815 = vadd.f32 %v763, %v799
        %vm816 = vcmask 125952
        %817 = vst.msk [vmem:[%s226] sm:$0xf] %vm816, %v800
        %818 = vst.msk [vmem:[%s226 + $0x4] sm:$0xf] %vm816, %v801
        %819 = vst.msk [vmem:[%s226 + $0x8] sm:$0xf] %vm816, %v802
        %820 = vst.msk [vmem:[%s226 + $0xc] sm:$0xf] %vm816, %v803
        %821 = vst.msk [vmem:[%s226 + $0x10] sm:$0xf] %vm816, %v804
        %822 = vst.msk [vmem:[%s226 + $0x14] sm:$0xf] %vm816, %v805
        %823 = vst.msk [vmem:[%s226 + $0x18] sm:$0xf] %vm816, %v806
        %824 = vst.msk [vmem:[%s226 + $0x1c] sm:$0xf] %vm816, %v807
        %825 = vst.msk [vmem:[%s226 + $0x20] sm:$0xf] %vm816, %v808
        %826 = vst.msk [vmem:[%s226 + $0x24] sm:$0xf] %vm816, %v809
        %827 = vst.msk [vmem:[%s226 + $0x28] sm:$0xf] %vm816, %v810
        %828 = vst.msk [vmem:[%s226 + $0x2c] sm:$0xf] %vm816, %v811
        %829 = vst.msk [vmem:[%s226 + $0x30] sm:$0xf] %vm816, %v812
        %830 = vst.msk [vmem:[%s226 + $0x34] sm:$0xf] %vm816, %v813
        %831 = vst.msk [vmem:[%s226 + $0x38] sm:$0xf] %vm816, %v814
        %832 = vst.msk [vmem:[%s226 + $0x3c] sm:$0xf] %vm816, %v815
        %s833 = sand.u32 %s105, 1
        %s834 = scalar_lea.sflag [#allocation4], %s833
        %s835 = sand.u32 %s105, 1
        %s836 = smul.addr %s835, 64
        %s837 = scalar_lea.vmem [#allocation7], %s836
        // Predicated region
        $region37: #{tpu_custom_call.1} parent=27 // pred_check
          %p838 = pneg %p115
        $region38: #{tpu_custom_call.1} parent=27 // pred_check_branch
          %840 = sbr.rel (%p838) target = $region40
        $region39: #{tpu_custom_call.1} parent=27 // pred_region
          %s841 = smul.u32 16, %s29
          %s843 = ssub.s32 1024, 1024
          %844 = vsyncadd %s834, %s843
          %s845 = smul.addr %s27, 16
          %s846 = sadd.s32 %s841, %s845
          %s847 = smul.addr %s846, 64
          %s848 = scalar_lea.hbm %s2, %s847
          %s849 = sshll.u32 %s837, 4
          %s850 = int_to_ptr.vmem [resolvable:$true] %s849
          %855 = dma.vmem_to_hbm [thread:$0]  %s850, 1024, %s848, %s834, 64, 64, 4
        $region40: #{tpu_custom_call.1} parent=27 // pred_fallthru
          _
      $region28: #{tpu_custom_call.1} parent=5 // pred_fallthru
        _
      %p856 = scmp.le.s32.totalorder 2, %s17
      // Predicated region
      $region41: #{tpu_custom_call.1} parent=5 // pred_check
        %p857 = pneg %p856
      $region42: #{tpu_custom_call.1} parent=5 // pred_check_branch
        %859 = sbr.rel (%p857) target = $region44
      $region43: #{tpu_custom_call.1} parent=5 // pred_region
        %s860 = ssub.s32 %s17, 2
        // Predicated region
        $region45: #{tpu_custom_call.1} parent=43 // pred_check
          %p861 = pneg %p121
        $region46: #{tpu_custom_call.1} parent=43 // pred_check_branch
          %863 = sbr.rel (%p861) target = $region48
        $region47: #{tpu_custom_call.1} parent=43 // pred_region
          %s864 = sand.u32 %s106, 1
          %s865 = scalar_lea.sflag [#allocation4], %s864
          %s866 = sand.u32 %s106, 1
          %s867 = smul.addr %s866, 64
          %s868 = scalar_lea.vmem [#allocation7], %s867
          %869 = dma.done %s865, 1024
        $region48: #{tpu_custom_call.1} parent=43 // pred_fallthru
          _
      $region44: #{tpu_custom_call.1} parent=5 // pred_fallthru
        _
    $region6: #{tpu_custom_call.1} parent=1 // loop_footer
      %s21 = sadd.s32 1, %s17
    $region7: #{tpu_custom_call.1} parent=1 // loop_footer_branch
      %16 = sbr.rel target = $region3
    $region8: #{tpu_custom_call.1} parent=1 // loop_exit
      _
    %870 = vsyncpa [#allocation3], 1
    %s871 = scalar_lea.sflag [#allocation3], 1
    %872 = vsyncpa %s871, 1
    %873 = vsyncpa [#allocation6], 1
    %s874 = scalar_lea.sflag [#allocation6], 1
    %875 = vsyncpa %s874, 1
    %876 = vsyncpa [#allocation4], 1
    %s877 = scalar_lea.sflag [#allocation4], 1
    %878 = vsyncpa %s877, 1

</llo_original>
